<compile_context>
chip_gen: v7x
topology: tpu7x:2x2x1
jax: 0.10.0
libtpu: 0.0.40
codegen_flags: <defaults>
</compile_context>

<pallas_src>
import functools

import jax
import jax.numpy as jnp
from jax.experimental import pallas as pl
from jax.experimental.pallas import tpu as pltpu


def mlp_kernel(x_ref, w1_ref, b1_ref, w2_ref, b2_ref, w3_ref, b3_ref, o_ref):
    # layer 1: Linear (bf16 MXU, f32 acc) + bias + ReLU (f32 VPU)
    h1 = jnp.dot(x_ref[...], w1_ref[...], preferred_element_type=jnp.float32)
    h1 = jnp.maximum(h1 + b1_ref[...], 0.0)
    # layer 2
    h2 = jnp.dot(h1.astype(jnp.bfloat16), w2_ref[...],
                 preferred_element_type=jnp.float32)
    h2 = jnp.maximum(h2 + b2_ref[...], 0.0)
    # layer 3 + Sigmoid (EUP)
    logits = jnp.dot(h2.astype(jnp.bfloat16), w3_ref[...],
                     preferred_element_type=jnp.float32)
    logits = logits + b3_ref[...]
    o_ref[...] = jax.nn.sigmoid(logits).astype(o_ref.dtype)


def _round_up(n, m):
    return ((n + m - 1) // m) * m


@functools.partial(jax.jit, static_argnames=("tm",))
def mlp_forward(x, params, *, tm=None):
    """x: (B, C, H, W) float32. params: list of (W_i, b_i), W_i (in, out), b_i (1, out)."""
    (w1, b1), (w2, b2), (w3, b3) = params
    B = x.shape[0]
    x2d = x.reshape(B, -1)                      # matches torch x.reshape(x.shape[0], -1)
    in_dim = x2d.shape[1]
    h1_dim = w1.shape[1]
    h2_dim = w2.shape[1]
    out_dim = w3.shape[1]

    # Lane-dense padded output (multiple of 128); padded cols sliced off below.
    out_pad = _round_up(max(out_dim, 128), 128)
    w3p = jnp.zeros((h2_dim, out_pad), w3.dtype).at[:, :out_dim].set(w3)
    b3p = jnp.zeros((1, out_pad), b3.dtype).at[:, :out_dim].set(b3)

    # bf16 operands for the MXU; biases stay f32.
    x_bf = x2d.astype(jnp.bfloat16)
    w1b = w1.astype(jnp.bfloat16)
    w2b = w2.astype(jnp.bfloat16)
    w3b = w3p.astype(jnp.bfloat16)

    # Batch tile: multiple of 16 (bf16 sublane pack), capped at 256 (MXU rows on
    # v6e/v7x; also fine on v5e's 128-row MXU). Pad B up to a tile multiple.
    if tm is None:
        tm = min(256, _round_up(max(B, 16), 16))
    b_pad = _round_up(B, tm)
    if b_pad != B:
        x_bf = jnp.pad(x_bf, ((0, b_pad - B), (0, 0)))
    grid = (b_pad // tm,)

    cost = pl.CostEstimate(
        flops=2 * b_pad * (in_dim * h1_dim + h1_dim * h2_dim + h2_dim * out_pad),
        transcendentals=b_pad * out_pad,                       # sigmoid
        bytes_accessed=(x_bf.size * 2                          # bf16 input
                        + (w1b.size + w2b.size + w3b.size) * 2 # bf16 resident weights
                        + (b1.size + b2.size + b3p.size) * 4   # f32 biases
                        + b_pad * out_pad * 4),                # f32 output
    )

    out_padded = pl.pallas_call(
        mlp_kernel,
        out_shape=jax.ShapeDtypeStruct((b_pad, out_pad), jnp.float32),
        grid=grid,
        in_specs=[
            # x tile: streamed / double-buffered per grid step.
            pl.BlockSpec((tm, in_dim), lambda i: (i, 0)),
            # weights & biases: constant block index -> DMA'd once, VMEM-resident.
            pl.BlockSpec((in_dim, h1_dim), lambda i: (0, 0)),
            pl.BlockSpec((1, h1_dim), lambda i: (0, 0)),
            pl.BlockSpec((h1_dim, h2_dim), lambda i: (0, 0)),
            pl.BlockSpec((1, h2_dim), lambda i: (0, 0)),
            pl.BlockSpec((h2_dim, out_pad), lambda i: (0, 0)),
            pl.BlockSpec((1, out_pad), lambda i: (0, 0)),
        ],
        out_specs=pl.BlockSpec((tm, out_pad), lambda i: (i, 0)),
        compiler_params=pltpu.CompilerParams(
            dimension_semantics=("parallel",),   # 2 TCs on v7x; harmless elsewhere
        ),
        cost_estimate=cost,
    )(x_bf, w1b, b1, w2b, b2, w3b, b3p)

    # TODO(synk): for B~2 serving, keep weights VMEM-resident across calls (P10)
    # instead of re-DMAing them every invocation.
    return out_padded[:B, :out_dim]


def init_params(key, config):
    """Deterministic init matching nn.Linear's U(-1/sqrt(fan_in), 1/sqrt(fan_in))."""
    params = []
    for i in range(len(config) - 1):
        fan_in, fan_out = config[i], config[i + 1]
        key, kw, kb = jax.random.split(key, 3)
        bound = 1.0 / (fan_in ** 0.5)
        w = jax.random.uniform(kw, (fan_in, fan_out), jnp.float32, -bound, bound)
        b = jax.random.uniform(kb, (1, fan_out), jnp.float32, -bound, bound)
        params.append((w, b))
    return params


if __name__ == "__main__":
    # Small shapes consistent with the module: x (2, 4, 16, 16) -> flattened dim 1024
    B, C, H, W = 2, 4, 16, 16
    in_dim = C * H * W
    config = [in_dim, 256, 128, 10]  # mirrors [input, 256, 128, output_dim]

    key = jax.random.PRNGKey(0)
    key, kx = jax.random.split(key)
    x = jax.random.normal(kx, (B, C, H, W), jnp.float32)
    params = init_params(key, config)

    out = jax.block_until_ready(mlp_forward(x, params))

    # Reference mirroring the kernel's numerics (bf16 MXU inputs, f32 accumulate).
    (w1, b1), (w2, b2), (w3, b3) = params
    xr = x.reshape(B, -1).astype(jnp.bfloat16)
    h = jnp.dot(xr, w1.astype(jnp.bfloat16), preferred_element_type=jnp.float32) + b1
    h = jnp.maximum(h, 0.0).astype(jnp.bfloat16)
    h = jnp.dot(h, w2.astype(jnp.bfloat16), preferred_element_type=jnp.float32) + b2
    h = jnp.maximum(h, 0.0).astype(jnp.bfloat16)
    logits = jnp.dot(h, w3.astype(jnp.bfloat16), preferred_element_type=jnp.float32) + b3
    ref = jax.nn.sigmoid(logits)

    assert out.shape == (B, config[-1])
    assert jnp.allclose(out, ref, atol=2e-3, rtol=2e-3), float(jnp.max(jnp.abs(out - ref)))

    print("KERNEL_OK")
</pallas_src>

<mosaic_0001>
module attributes {stable_mosaic.version = 11 : i64} {
  func.func @mlp_kernel(%arg0: i32, %arg1: memref<16x1024xbf16, #tpu.memory_space<vmem>>, %arg2: memref<1024x256xbf16, #tpu.memory_space<vmem>>, %arg3: memref<1x256xf32, #tpu.memory_space<vmem>>, %arg4: memref<256x128xbf16, #tpu.memory_space<vmem>>, %arg5: memref<1x128xf32, #tpu.memory_space<vmem>>, %arg6: memref<128x128xbf16, #tpu.memory_space<vmem>>, %arg7: memref<1x128xf32, #tpu.memory_space<vmem>>, %arg8: memref<16x128xf32, #tpu.memory_space<vmem>>) attributes {dimension_semantics = [#tpu.dimension_semantics<parallel>], iteration_bounds = array<i64: 1>, scalar_prefetch = 0 : i64, scratch_operands = 0 : i64, tpu.core_type = #tpu.core_type<tc>, window_params = [{transform_indices = @transform_0, window_bounds = array<i64: 16, 1024>}, {pipeline_mode = #tpu.pipeline_mode<synchronous>, transform_indices = @transform_1, window_bounds = array<i64: 1024, 256>}, {pipeline_mode = #tpu.pipeline_mode<synchronous>, transform_indices = @transform_2, window_bounds = array<i64: 1, 256>}, {pipeline_mode = #tpu.pipeline_mode<synchronous>, transform_indices = @transform_3, window_bounds = array<i64: 256, 128>}, {pipeline_mode = #tpu.pipeline_mode<synchronous>, transform_indices = @transform_4, window_bounds = array<i64: 1, 128>}, {pipeline_mode = #tpu.pipeline_mode<synchronous>, transform_indices = @transform_5, window_bounds = array<i64: 128, 128>}, {pipeline_mode = #tpu.pipeline_mode<synchronous>, transform_indices = @transform_6, window_bounds = array<i64: 1, 128>}, {transform_indices = @transform_7, window_bounds = array<i64: 16, 128>}]} {
    %c0 = arith.constant 0 : index
    %c0_0 = arith.constant 0 : index
    %0 = vector.load %arg1[%c0, %c0_0] : memref<16x1024xbf16, #tpu.memory_space<vmem>>, vector<16x1024xbf16>
    %c0_1 = arith.constant 0 : index
    %c0_2 = arith.constant 0 : index
    %1 = vector.load %arg2[%c0_1, %c0_2] : memref<1024x256xbf16, #tpu.memory_space<vmem>>, vector<1024x256xbf16>
    %cst = arith.constant dense<0.000000e+00> : vector<16x256xf32>
    %2 = tpu.matmul %0, %1, %cst {dimension_numbers = #tpu.dot_dimension_numbers<[1], [0], [0], [1], [0, 0, 1, 1], [], []>} : vector<16x1024xbf16>, vector<1024x256xbf16>, vector<16x256xf32> -> vector<16x256xf32>
    %c0_3 = arith.constant 0 : index
    %c0_4 = arith.constant 0 : index
    %3 = vector.load %arg3[%c0_3, %c0_4] : memref<1x256xf32, #tpu.memory_space<vmem>>, vector<1x256xf32>
    %4 = vector.broadcast %3 : vector<1x256xf32> to vector<16x256xf32>
    %5 = arith.addf %2, %4 : vector<16x256xf32>
    %cst_5 = arith.constant 0.000000e+00 : f32
    %6 = vector.broadcast %cst_5 : f32 to vector<16x256xf32>
    %7 = arith.maximumf %5, %6 : vector<16x256xf32>
    %8 = arith.truncf %7 : vector<16x256xf32> to vector<16x256xbf16>
    %c0_6 = arith.constant 0 : index
    %c0_7 = arith.constant 0 : index
    %9 = vector.load %arg4[%c0_6, %c0_7] : memref<256x128xbf16, #tpu.memory_space<vmem>>, vector<256x128xbf16>
    %cst_8 = arith.constant dense<0.000000e+00> : vector<16x128xf32>
    %10 = tpu.matmul %8, %9, %cst_8 {dimension_numbers = #tpu.dot_dimension_numbers<[1], [0], [0], [1], [0, 0, 1, 1], [], []>} : vector<16x256xbf16>, vector<256x128xbf16>, vector<16x128xf32> -> vector<16x128xf32>
    %c0_9 = arith.constant 0 : index
    %c0_10 = arith.constant 0 : index
    %11 = vector.load %arg5[%c0_9, %c0_10] : memref<1x128xf32, #tpu.memory_space<vmem>>, vector<1x128xf32>
    %12 = vector.broadcast %11 : vector<1x128xf32> to vector<16x128xf32>
    %13 = arith.addf %10, %12 : vector<16x128xf32>
    %cst_11 = arith.constant 0.000000e+00 : f32
    %14 = vector.broadcast %cst_11 : f32 to vector<16x128xf32>
    %15 = arith.maximumf %13, %14 : vector<16x128xf32>
    %16 = arith.truncf %15 : vector<16x128xf32> to vector<16x128xbf16>
    %c0_12 = arith.constant 0 : index
    %c0_13 = arith.constant 0 : index
    %17 = vector.load %arg6[%c0_12, %c0_13] : memref<128x128xbf16, #tpu.memory_space<vmem>>, vector<128x128xbf16>
    %cst_14 = arith.constant dense<0.000000e+00> : vector<16x128xf32>
    %18 = tpu.matmul %16, %17, %cst_14 {dimension_numbers = #tpu.dot_dimension_numbers<[1], [0], [0], [1], [0, 0, 1, 1], [], []>} : vector<16x128xbf16>, vector<128x128xbf16>, vector<16x128xf32> -> vector<16x128xf32>
    %c0_15 = arith.constant 0 : index
    %c0_16 = arith.constant 0 : index
    %19 = vector.load %arg7[%c0_15, %c0_16] : memref<1x128xf32, #tpu.memory_space<vmem>>, vector<1x128xf32>
    %20 = vector.broadcast %19 : vector<1x128xf32> to vector<16x128xf32>
    %21 = arith.addf %18, %20 : vector<16x128xf32>
    %22 = arith.negf %21 : vector<16x128xf32>
    %23 = math.exp %22 : vector<16x128xf32>
    %cst_17 = arith.constant 1.000000e+00 : f32
    %24 = vector.broadcast %cst_17 : f32 to vector<16x128xf32>
    %25 = arith.addf %24, %23 : vector<16x128xf32>
    %26 = arith.divf %24, %25 : vector<16x128xf32>
    %c0_18 = arith.constant 0 : index
    %c0_19 = arith.constant 0 : index
    %27 = vector.load %arg8[%c0_18, %c0_19] : memref<16x128xf32, #tpu.memory_space<vmem>>, vector<16x128xf32>
    tpu.vector_store %arg8[%c0_18, %c0_19], %26 {strides = array<i32>} : memref<16x128xf32, #tpu.memory_space<vmem>>, vector<16x128xf32>,
    return
  }
  func.func @transform_0(%arg0: i32) -> (i32, i32) {
    %c0_i32 = arith.constant 0 : i32
    %c0_i32_0 = arith.constant 0 : i32
    return %arg0, %c0_i32 : i32, i32
  }
  func.func @transform_1(%arg0: i32) -> (i32, i32) {
    %c0_i32 = arith.constant 0 : i32
    %c0_i32_0 = arith.constant 0 : i32
    %c0_i32_1 = arith.constant 0 : i32
    return %c0_i32, %c0_i32_0 : i32, i32
  }
  func.func @transform_2(%arg0: i32) -> (i32, i32) {
    %c0_i32 = arith.constant 0 : i32
    %c0_i32_0 = arith.constant 0 : i32
    %c0_i32_1 = arith.constant 0 : i32
    return %c0_i32, %c0_i32_0 : i32, i32
  }
  func.func @transform_3(%arg0: i32) -> (i32, i32) {
    %c0_i32 = arith.constant 0 : i32
    %c0_i32_0 = arith.constant 0 : i32
    %c0_i32_1 = arith.constant 0 : i32
    return %c0_i32, %c0_i32_0 : i32, i32
  }
  func.func @transform_4(%arg0: i32) -> (i32, i32) {
    %c0_i32 = arith.constant 0 : i32
    %c0_i32_0 = arith.constant 0 : i32
    %c0_i32_1 = arith.constant 0 : i32
    return %c0_i32, %c0_i32_0 : i32, i32
  }
  func.func @transform_5(%arg0: i32) -> (i32, i32) {
    %c0_i32 = arith.constant 0 : i32
    %c0_i32_0 = arith.constant 0 : i32
    %c0_i32_1 = arith.constant 0 : i32
    return %c0_i32, %c0_i32_0 : i32, i32
  }
  func.func @transform_6(%arg0: i32) -> (i32, i32) {
    %c0_i32 = arith.constant 0 : i32
    %c0_i32_0 = arith.constant 0 : i32
    %c0_i32_1 = arith.constant 0 : i32
    return %c0_i32, %c0_i32_0 : i32, i32
  }
  func.func @transform_7(%arg0: i32) -> (i32, i32) {
    %c0_i32 = arith.constant 0 : i32
    %c0_i32_0 = arith.constant 0 : i32
    return %arg0, %c0_i32 : i32, i32
  }
}

</mosaic_0001>

<llo_original>
// kernel: mlp_forward.1
$region0: #{mlp_forward.1}
  #allocation0 [shape = 'u32[]', space=smem, size = 0x4, offset = 0x4, fixed_abs, tag = 'smem constant byte address 0x4 - core index']
  #allocation1 [shape = 'u32[144,128]{1,0:T(1,128)}', space=vmem, size = 0x12000, scoped, tag = 'internal scratch']
  %s0 = inlined_call_operand.vmem [shape: bf16[16,1024], index: 0, kind: input, shape index: {}]
  %s1 = inlined_call_operand.vmem [shape: bf16[1024,256], index: 1, kind: input, shape index: {}]
  %s2 = inlined_call_operand.vmem [shape: f32[1,256], index: 2, kind: input, shape index: {}]
  %s3 = inlined_call_operand.vmem [shape: bf16[256,128], index: 3, kind: input, shape index: {}]
  %s4 = inlined_call_operand.vmem [shape: f32[1,128], index: 4, kind: input, shape index: {}]
  %s5 = inlined_call_operand.vmem [shape: bf16[128,128], index: 5, kind: input, shape index: {}]
  %s6 = inlined_call_operand.vmem [shape: f32[1,128], index: 6, kind: input, shape index: {}]
  %s7 = inlined_call_operand.vmem [shape: f32[16,128], index: 7, kind: output, shape index: {}]
  %s8 = sld [smem:[#allocation0]]
  $region38: #{mlp_forward.1} parent=0
    _
  %s10 = ssub.s32 1, %s8
  %s11 = scalar_select 0, %s10, %s8
  // Predicated region
  $region2: #{mlp_forward.1} parent=0 // pred_check
    _
  $region3: #{mlp_forward.1} parent=0 // pred_check_branch
    %13 = sbr.rel (0) target = $region5
  $region4: #{mlp_forward.1} parent=0 // pred_region
    _
  $region5: #{mlp_forward.1} parent=0 // pred_fallthru
    _
  // Predicated region
  $region6: #{mlp_forward.1} parent=0 // pred_check
    _
  $region7: #{mlp_forward.1} parent=0 // pred_check_branch
    %15 = sbr.rel (0) target = $region9
  $region8: #{mlp_forward.1} parent=0 // pred_region
    _
  $region9: #{mlp_forward.1} parent=0 // pred_fallthru
    _
  // Predicated region
  $region10: #{mlp_forward.1} parent=0 // pred_check
    _
  $region11: #{mlp_forward.1} parent=0 // pred_check_branch
    %17 = sbr.rel (0) target = $region13
  $region12: #{mlp_forward.1} parent=0 // pred_region
    _
  $region13: #{mlp_forward.1} parent=0 // pred_fallthru
    _
  // Predicated region
  $region14: #{mlp_forward.1} parent=0 // pred_check
    _
  $region15: #{mlp_forward.1} parent=0 // pred_check_branch
    %19 = sbr.rel (0) target = $region17
  $region16: #{mlp_forward.1} parent=0 // pred_region
    _
  $region17: #{mlp_forward.1} parent=0 // pred_fallthru
    _
  // Predicated region
  $region18: #{mlp_forward.1} parent=0 // pred_check
    _
  $region19: #{mlp_forward.1} parent=0 // pred_check_branch
    %21 = sbr.rel (0) target = $region21
  $region20: #{mlp_forward.1} parent=0 // pred_region
    _
  $region21: #{mlp_forward.1} parent=0 // pred_fallthru
    _
  // Predicated region
  $region22: #{mlp_forward.1} parent=0 // pred_check
    _
  $region23: #{mlp_forward.1} parent=0 // pred_check_branch
    %23 = sbr.rel (0) target = $region25
  $region24: #{mlp_forward.1} parent=0 // pred_region
    _
  $region25: #{mlp_forward.1} parent=0 // pred_fallthru
    _
  // Predicated region
  $region26: #{mlp_forward.1} parent=0 // pred_check
    _
  $region27: #{mlp_forward.1} parent=0 // pred_check_branch
    %25 = sbr.rel (0) target = $region29
  $region28: #{mlp_forward.1} parent=0 // pred_region
    _
  $region29: #{mlp_forward.1} parent=0 // pred_fallthru
    _
  %v27 = vld [vmem:[%s0] sm:$0xff]
  %v28 = vld [vmem:[%s0 + $0x8] sm:$0xff]
  %v29 = vld [vmem:[%s0 + $0x10] sm:$0xff]
  %v30 = vld [vmem:[%s0 + $0x18] sm:$0xff]
  %v31 = vld [vmem:[%s0 + $0x20] sm:$0xff]
  %v32 = vld [vmem:[%s0 + $0x28] sm:$0xff]
  %v33 = vld [vmem:[%s0 + $0x30] sm:$0xff]
  %v34 = vld [vmem:[%s0 + $0x38] sm:$0xff]
  %v35 = vld [vmem:[%s1] sm:$0xff]
  %v36 = vld [vmem:[%s1 + $0x8] sm:$0xff]
  %v37 = vld [vmem:[%s1 + $0x10] sm:$0xff]
  %v38 = vld [vmem:[%s1 + $0x18] sm:$0xff]
  %v39 = vld [vmem:[%s1 + $0x20] sm:$0xff]
  %v40 = vld [vmem:[%s1 + $0x28] sm:$0xff]
  %v41 = vld [vmem:[%s1 + $0x30] sm:$0xff]
  %v42 = vld [vmem:[%s1 + $0x38] sm:$0xff]
  %v43 = vld [vmem:[%s1 + $0x40] sm:$0xff]
  %v44 = vld [vmem:[%s1 + $0x48] sm:$0xff]
  %v45 = vld [vmem:[%s1 + $0x50] sm:$0xff]
  %v46 = vld [vmem:[%s1 + $0x58] sm:$0xff]
  %v47 = vld [vmem:[%s1 + $0x60] sm:$0xff]
  %v48 = vld [vmem:[%s1 + $0x68] sm:$0xff]
  %v49 = vld [vmem:[%s1 + $0x70] sm:$0xff]
  %v50 = vld [vmem:[%s1 + $0x78] sm:$0xff]
  %v51 = vld [vmem:[%s1 + $0x80] sm:$0xff]
  %v52 = vld [vmem:[%s1 + $0x88] sm:$0xff]
  %v53 = vld [vmem:[%s1 + $0x90] sm:$0xff]
  %v54 = vld [vmem:[%s1 + $0x98] sm:$0xff]
  %v55 = vld [vmem:[%s1 + $0xa0] sm:$0xff]
  %v56 = vld [vmem:[%s1 + $0xa8] sm:$0xff]
  %v57 = vld [vmem:[%s1 + $0xb0] sm:$0xff]
  %v58 = vld [vmem:[%s1 + $0xb8] sm:$0xff]
  %v59 = vld [vmem:[%s1 + $0xc0] sm:$0xff]
  %v60 = vld [vmem:[%s1 + $0xc8] sm:$0xff]
  %v61 = vld [vmem:[%s1 + $0xd0] sm:$0xff]
  %v62 = vld [vmem:[%s1 + $0xd8] sm:$0xff]
  %v63 = vld [vmem:[%s1 + $0xe0] sm:$0xff]
  %v64 = vld [vmem:[%s1 + $0xe8] sm:$0xff]
  %v65 = vld [vmem:[%s1 + $0xf0] sm:$0xff]
  %v66 = vld [vmem:[%s1 + $0xf8] sm:$0xff]
  %v67 = vld [vmem:[%s1 + $0x100] sm:$0xff]
  %v68 = vld [vmem:[%s1 + $0x108] sm:$0xff]
  %v69 = vld [vmem:[%s1 + $0x110] sm:$0xff]
  %v70 = vld [vmem:[%s1 + $0x118] sm:$0xff]
  %v71 = vld [vmem:[%s1 + $0x120] sm:$0xff]
  %v72 = vld [vmem:[%s1 + $0x128] sm:$0xff]
  %v73 = vld [vmem:[%s1 + $0x130] sm:$0xff]
  %v74 = vld [vmem:[%s1 + $0x138] sm:$0xff]
  %v75 = vld [vmem:[%s1 + $0x140] sm:$0xff]
  %v76 = vld [vmem:[%s1 + $0x148] sm:$0xff]
  %v77 = vld [vmem:[%s1 + $0x150] sm:$0xff]
  %v78 = vld [vmem:[%s1 + $0x158] sm:$0xff]
  %v79 = vld [vmem:[%s1 + $0x160] sm:$0xff]
  %v80 = vld [vmem:[%s1 + $0x168] sm:$0xff]
  %v81 = vld [vmem:[%s1 + $0x170] sm:$0xff]
  %v82 = vld [vmem:[%s1 + $0x178] sm:$0xff]
  %v83 = vld [vmem:[%s1 + $0x180] sm:$0xff]
  %v84 = vld [vmem:[%s1 + $0x188] sm:$0xff]
  %v85 = vld [vmem:[%s1 + $0x190] sm:$0xff]
  %v86 = vld [vmem:[%s1 + $0x198] sm:$0xff]
  %v87 = vld [vmem:[%s1 + $0x1a0] sm:$0xff]
  %v88 = vld [vmem:[%s1 + $0x1a8] sm:$0xff]
  %v89 = vld [vmem:[%s1 + $0x1b0] sm:$0xff]
  %v90 = vld [vmem:[%s1 + $0x1b8] sm:$0xff]
  %v91 = vld [vmem:[%s1 + $0x1c0] sm:$0xff]
  %v92 = vld [vmem:[%s1 + $0x1c8] sm:$0xff]
  %v93 = vld [vmem:[%s1 + $0x1d0] sm:$0xff]
  %v94 = vld [vmem:[%s1 + $0x1d8] sm:$0xff]
  %v95 = vld [vmem:[%s1 + $0x1e0] sm:$0xff]
  %v96 = vld [vmem:[%s1 + $0x1e8] sm:$0xff]
  %v97 = vld [vmem:[%s1 + $0x1f0] sm:$0xff]
  %v98 = vld [vmem:[%s1 + $0x1f8] sm:$0xff]
  %v99 = vld [vmem:[%s1 + $0x200] sm:$0xff]
  %v100 = vld [vmem:[%s1 + $0x208] sm:$0xff]
  %v101 = vld [vmem:[%s1 + $0x210] sm:$0xff]
  %v102 = vld [vmem:[%s1 + $0x218] sm:$0xff]
  %v103 = vld [vmem:[%s1 + $0x220] sm:$0xff]
  %v104 = vld [vmem:[%s1 + $0x228] sm:$0xff]
  %v105 = vld [vmem:[%s1 + $0x230] sm:$0xff]
  %v106 = vld [vmem:[%s1 + $0x238] sm:$0xff]
  %v107 = vld [vmem:[%s1 + $0x240] sm:$0xff]
  %v108 = vld [vmem:[%s1 + $0x248] sm:$0xff]
  %v109 = vld [vmem:[%s1 + $0x250] sm:$0xff]
  %v110 = vld [vmem:[%s1 + $0x258] sm:$0xff]
  %v111 = vld [vmem:[%s1 + $0x260] sm:$0xff]
  %v112 = vld [vmem:[%s1 + $0x268] sm:$0xff]
  %v113 = vld [vmem:[%s1 + $0x270] sm:$0xff]
  %v114 = vld [vmem:[%s1 + $0x278] sm:$0xff]
  %v115 = vld [vmem:[%s1 + $0x280] sm:$0xff]
  %v116 = vld [vmem:[%s1 + $0x288] sm:$0xff]
  %v117 = vld [vmem:[%s1 + $0x290] sm:$0xff]
  %v118 = vld [vmem:[%s1 + $0x298] sm:$0xff]
  %v119 = vld [vmem:[%s1 + $0x2a0] sm:$0xff]
  %v120 = vld [vmem:[%s1 + $0x2a8] sm:$0xff]
  %v121 = vld [vmem:[%s1 + $0x2b0] sm:$0xff]
  %v122 = vld [vmem:[%s1 + $0x2b8] sm:$0xff]
  %v123 = vld [vmem:[%s1 + $0x2c0] sm:$0xff]
  %v124 = vld [vmem:[%s1 + $0x2c8] sm:$0xff]
  %v125 = vld [vmem:[%s1 + $0x2d0] sm:$0xff]
  %v126 = vld [vmem:[%s1 + $0x2d8] sm:$0xff]
  %v127 = vld [vmem:[%s1 + $0x2e0] sm:$0xff]
  %v128 = vld [vmem:[%s1 + $0x2e8] sm:$0xff]
  %v129 = vld [vmem:[%s1 + $0x2f0] sm:$0xff]
  %v130 = vld [vmem:[%s1 + $0x2f8] sm:$0xff]
  %v131 = vld [vmem:[%s1 + $0x300] sm:$0xff]
  %v132 = vld [vmem:[%s1 + $0x308] sm:$0xff]
  %v133 = vld [vmem:[%s1 + $0x310] sm:$0xff]
  %v134 = vld [vmem:[%s1 + $0x318] sm:$0xff]
  %v135 = vld [vmem:[%s1 + $0x320] sm:$0xff]
  %v136 = vld [vmem:[%s1 + $0x328] sm:$0xff]
  %v137 = vld [vmem:[%s1 + $0x330] sm:$0xff]
  %v138 = vld [vmem:[%s1 + $0x338] sm:$0xff]
  %v139 = vld [vmem:[%s1 + $0x340] sm:$0xff]
  %v140 = vld [vmem:[%s1 + $0x348] sm:$0xff]
  %v141 = vld [vmem:[%s1 + $0x350] sm:$0xff]
  %v142 = vld [vmem:[%s1 + $0x358] sm:$0xff]
  %v143 = vld [vmem:[%s1 + $0x360] sm:$0xff]
  %v144 = vld [vmem:[%s1 + $0x368] sm:$0xff]
  %v145 = vld [vmem:[%s1 + $0x370] sm:$0xff]
  %v146 = vld [vmem:[%s1 + $0x378] sm:$0xff]
  %v147 = vld [vmem:[%s1 + $0x380] sm:$0xff]
  %v148 = vld [vmem:[%s1 + $0x388] sm:$0xff]
  %v149 = vld [vmem:[%s1 + $0x390] sm:$0xff]
  %v150 = vld [vmem:[%s1 + $0x398] sm:$0xff]
  %v151 = vld [vmem:[%s1 + $0x3a0] sm:$0xff]
  %v152 = vld [vmem:[%s1 + $0x3a8] sm:$0xff]
  %v153 = vld [vmem:[%s1 + $0x3b0] sm:$0xff]
  %v154 = vld [vmem:[%s1 + $0x3b8] sm:$0xff]
  %v155 = vld [vmem:[%s1 + $0x3c0] sm:$0xff]
  %v156 = vld [vmem:[%s1 + $0x3c8] sm:$0xff]
  %v157 = vld [vmem:[%s1 + $0x3d0] sm:$0xff]
  %v158 = vld [vmem:[%s1 + $0x3d8] sm:$0xff]
  %v159 = vld [vmem:[%s1 + $0x3e0] sm:$0xff]
  %v160 = vld [vmem:[%s1 + $0x3e8] sm:$0xff]
  %v161 = vld [vmem:[%s1 + $0x3f0] sm:$0xff]
  %v162 = vld [vmem:[%s1 + $0x3f8] sm:$0xff]
  %v163 = vld [vmem:[%s2] sm:$0x3]
  %v165 = vlaneseq
  %v166 = vshrl.u32 %v165, 7
  %v167 = vsub.s32 0, %v166
  %v168 = vrot.slane %v163, %v167
  %v169 = vlaneseq
  %v170 = vshrl.u32 %v169, 7
  %v171 = vsub.s32 1, %v170
  %v172 = vrot.slane %v163, %v171
  %v183 = vunpack.c.l.b16 %v27
  %v184 = vunpack.c.h.b16 %v27
  %v185 = vunpack.c.l.b16 %v28
  %v186 = vunpack.c.h.b16 %v28
  %v187 = vunpack.c.l.b16 %v29
  %v188 = vunpack.c.h.b16 %v29
  %v189 = vunpack.c.l.b16 %v30
  %v190 = vunpack.c.h.b16 %v30
  %v191 = vunpack.c.l.b16 %v31
  %v192 = vunpack.c.h.b16 %v31
  %v193 = vunpack.c.l.b16 %v32
  %v194 = vunpack.c.h.b16 %v32
  %v195 = vunpack.c.l.b16 %v33
  %v196 = vunpack.c.h.b16 %v33
  %v197 = vunpack.c.l.b16 %v34
  %v198 = vunpack.c.h.b16 %v34
  %v199 = vpack.c.b16 %v191, %v183
  %v200 = vpack.c.b16 %v192, %v184
  %v201 = vpack.c.b16 %v193, %v185
  %v202 = vpack.c.b16 %v194, %v186
  %v203 = vpack.c.b16 %v195, %v187
  %v204 = vpack.c.b16 %v196, %v188
  %v205 = vpack.c.b16 %v197, %v189
  %v206 = vpack.c.b16 %v198, %v190
  %v343 = vunpack.c.l.b16 %v35
  %v344 = vunpack.c.h.b16 %v35
  %v345 = vunpack.c.l.b16 %v36
  %v346 = vunpack.c.h.b16 %v36
  %v347 = vunpack.c.l.b16 %v37
  %v348 = vunpack.c.h.b16 %v37
  %v349 = vunpack.c.l.b16 %v38
  %v350 = vunpack.c.h.b16 %v38
  %v351 = vunpack.c.l.b16 %v39
  %v352 = vunpack.c.h.b16 %v39
  %v353 = vunpack.c.l.b16 %v40
  %v354 = vunpack.c.h.b16 %v40
  %v355 = vunpack.c.l.b16 %v41
  %v356 = vunpack.c.h.b16 %v41
  %v357 = vunpack.c.l.b16 %v42
  %v358 = vunpack.c.h.b16 %v42
  %v359 = vunpack.c.l.b16 %v43
  %v360 = vunpack.c.h.b16 %v43
  %v361 = vunpack.c.l.b16 %v44
  %v362 = vunpack.c.h.b16 %v44
  %v363 = vunpack.c.l.b16 %v45
  %v364 = vunpack.c.h.b16 %v45
  %v365 = vunpack.c.l.b16 %v46
  %v366 = vunpack.c.h.b16 %v46
  %v367 = vunpack.c.l.b16 %v47
  %v368 = vunpack.c.h.b16 %v47
  %v369 = vunpack.c.l.b16 %v48
  %v370 = vunpack.c.h.b16 %v48
  %v371 = vunpack.c.l.b16 %v49
  %v372 = vunpack.c.h.b16 %v49
  %v373 = vunpack.c.l.b16 %v50
  %v374 = vunpack.c.h.b16 %v50
  %v375 = vunpack.c.l.b16 %v51
  %v376 = vunpack.c.h.b16 %v51
  %v377 = vunpack.c.l.b16 %v52
  %v378 = vunpack.c.h.b16 %v52
  %v379 = vunpack.c.l.b16 %v53
  %v380 = vunpack.c.h.b16 %v53
  %v381 = vunpack.c.l.b16 %v54
  %v382 = vunpack.c.h.b16 %v54
  %v383 = vunpack.c.l.b16 %v55
  %v384 = vunpack.c.h.b16 %v55
  %v385 = vunpack.c.l.b16 %v56
  %v386 = vunpack.c.h.b16 %v56
  %v387 = vunpack.c.l.b16 %v57
  %v388 = vunpack.c.h.b16 %v57
  %v389 = vunpack.c.l.b16 %v58
  %v390 = vunpack.c.h.b16 %v58
  %v391 = vunpack.c.l.b16 %v59
  %v392 = vunpack.c.h.b16 %v59
  %v393 = vunpack.c.l.b16 %v60
  %v394 = vunpack.c.h.b16 %v60
  %v395 = vunpack.c.l.b16 %v61
  %v396 = vunpack.c.h.b16 %v61
  %v397 = vunpack.c.l.b16 %v62
  %v398 = vunpack.c.h.b16 %v62
  %v399 = vunpack.c.l.b16 %v63
  %v400 = vunpack.c.h.b16 %v63
  %v401 = vunpack.c.l.b16 %v64
  %v402 = vunpack.c.h.b16 %v64
  %v403 = vunpack.c.l.b16 %v65
  %v404 = vunpack.c.h.b16 %v65
  %v405 = vunpack.c.l.b16 %v66
  %v406 = vunpack.c.h.b16 %v66
  %v407 = vunpack.c.l.b16 %v67
  %v408 = vunpack.c.h.b16 %v67
  %v409 = vunpack.c.l.b16 %v68
  %v410 = vunpack.c.h.b16 %v68
  %v411 = vunpack.c.l.b16 %v69
  %v412 = vunpack.c.h.b16 %v69
  %v413 = vunpack.c.l.b16 %v70
  %v414 = vunpack.c.h.b16 %v70
  %v415 = vunpack.c.l.b16 %v71
  %v416 = vunpack.c.h.b16 %v71
  %v417 = vunpack.c.l.b16 %v72
  %v418 = vunpack.c.h.b16 %v72
  %v419 = vunpack.c.l.b16 %v73
  %v420 = vunpack.c.h.b16 %v73
  %v421 = vunpack.c.l.b16 %v74
  %v422 = vunpack.c.h.b16 %v74
  %v423 = vunpack.c.l.b16 %v75
  %v424 = vunpack.c.h.b16 %v75
  %v425 = vunpack.c.l.b16 %v76
  %v426 = vunpack.c.h.b16 %v76
  %v427 = vunpack.c.l.b16 %v77
  %v428 = vunpack.c.h.b16 %v77
  %v429 = vunpack.c.l.b16 %v78
  %v430 = vunpack.c.h.b16 %v78
  %v431 = vunpack.c.l.b16 %v79
  %v432 = vunpack.c.h.b16 %v79
  %v433 = vunpack.c.l.b16 %v80
  %v434 = vunpack.c.h.b16 %v80
  %v435 = vunpack.c.l.b16 %v81
  %v436 = vunpack.c.h.b16 %v81
  %v437 = vunpack.c.l.b16 %v82
  %v438 = vunpack.c.h.b16 %v82
  %v439 = vunpack.c.l.b16 %v83
  %v440 = vunpack.c.h.b16 %v83
  %v441 = vunpack.c.l.b16 %v84
  %v442 = vunpack.c.h.b16 %v84
  %v443 = vunpack.c.l.b16 %v85
  %v444 = vunpack.c.h.b16 %v85
  %v445 = vunpack.c.l.b16 %v86
  %v446 = vunpack.c.h.b16 %v86
  %v447 = vunpack.c.l.b16 %v87
  %v448 = vunpack.c.h.b16 %v87
  %v449 = vunpack.c.l.b16 %v88
  %v450 = vunpack.c.h.b16 %v88
  %v451 = vunpack.c.l.b16 %v89
  %v452 = vunpack.c.h.b16 %v89
  %v453 = vunpack.c.l.b16 %v90
  %v454 = vunpack.c.h.b16 %v90
  %v455 = vunpack.c.l.b16 %v91
  %v456 = vunpack.c.h.b16 %v91
  %v457 = vunpack.c.l.b16 %v92
  %v458 = vunpack.c.h.b16 %v92
  %v459 = vunpack.c.l.b16 %v93
  %v460 = vunpack.c.h.b16 %v93
  %v461 = vunpack.c.l.b16 %v94
  %v462 = vunpack.c.h.b16 %v94
  %v463 = vunpack.c.l.b16 %v95
  %v464 = vunpack.c.h.b16 %v95
  %v465 = vunpack.c.l.b16 %v96
  %v466 = vunpack.c.h.b16 %v96
  %v467 = vunpack.c.l.b16 %v97
  %v468 = vunpack.c.h.b16 %v97
  %v469 = vunpack.c.l.b16 %v98
  %v470 = vunpack.c.h.b16 %v98
  %v471 = vunpack.c.l.b16 %v99
  %v472 = vunpack.c.h.b16 %v99
  %v473 = vunpack.c.l.b16 %v100
  %v474 = vunpack.c.h.b16 %v100
  %v475 = vunpack.c.l.b16 %v101
  %v476 = vunpack.c.h.b16 %v101
  %v477 = vunpack.c.l.b16 %v102
  %v478 = vunpack.c.h.b16 %v102
  %v479 = vunpack.c.l.b16 %v103
  %v480 = vunpack.c.h.b16 %v103
  %v481 = vunpack.c.l.b16 %v104
  %v482 = vunpack.c.h.b16 %v104
  %v483 = vunpack.c.l.b16 %v105
  %v484 = vunpack.c.h.b16 %v105
  %v485 = vunpack.c.l.b16 %v106
  %v486 = vunpack.c.h.b16 %v106
  %v487 = vunpack.c.l.b16 %v107
  %v488 = vunpack.c.h.b16 %v107
  %v489 = vunpack.c.l.b16 %v108
  %v490 = vunpack.c.h.b16 %v108
  %v491 = vunpack.c.l.b16 %v109
  %v492 = vunpack.c.h.b16 %v109
  %v493 = vunpack.c.l.b16 %v110
  %v494 = vunpack.c.h.b16 %v110
  %v495 = vunpack.c.l.b16 %v111
  %v496 = vunpack.c.h.b16 %v111
  %v497 = vunpack.c.l.b16 %v112
  %v498 = vunpack.c.h.b16 %v112
  %v499 = vunpack.c.l.b16 %v113
  %v500 = vunpack.c.h.b16 %v113
  %v501 = vunpack.c.l.b16 %v114
  %v502 = vunpack.c.h.b16 %v114
  %v503 = vunpack.c.l.b16 %v115
  %v504 = vunpack.c.h.b16 %v115
  %v505 = vunpack.c.l.b16 %v116
  %v506 = vunpack.c.h.b16 %v116
  %v507 = vunpack.c.l.b16 %v117
  %v508 = vunpack.c.h.b16 %v117
  %v509 = vunpack.c.l.b16 %v118
  %v510 = vunpack.c.h.b16 %v118
  %v511 = vunpack.c.l.b16 %v119
  %v512 = vunpack.c.h.b16 %v119
  %v513 = vunpack.c.l.b16 %v120
  %v514 = vunpack.c.h.b16 %v120
  %v515 = vunpack.c.l.b16 %v121
  %v516 = vunpack.c.h.b16 %v121
  %v517 = vunpack.c.l.b16 %v122
  %v518 = vunpack.c.h.b16 %v122
  %v519 = vunpack.c.l.b16 %v123
  %v520 = vunpack.c.h.b16 %v123
  %v521 = vunpack.c.l.b16 %v124
  %v522 = vunpack.c.h.b16 %v124
  %v523 = vunpack.c.l.b16 %v125
  %v524 = vunpack.c.h.b16 %v125
  %v525 = vunpack.c.l.b16 %v126
  %v526 = vunpack.c.h.b16 %v126
  %v527 = vunpack.c.l.b16 %v127
  %v528 = vunpack.c.h.b16 %v127
  %v529 = vunpack.c.l.b16 %v128
  %v530 = vunpack.c.h.b16 %v128
  %v531 = vunpack.c.l.b16 %v129
  %v532 = vunpack.c.h.b16 %v129
  %v533 = vunpack.c.l.b16 %v130
  %v534 = vunpack.c.h.b16 %v130
  %v535 = vunpack.c.l.b16 %v131
  %v536 = vunpack.c.h.b16 %v131
  %v537 = vunpack.c.l.b16 %v132
  %v538 = vunpack.c.h.b16 %v132
  %v539 = vunpack.c.l.b16 %v133
  %v540 = vunpack.c.h.b16 %v133
  %v541 = vunpack.c.l.b16 %v134
  %v542 = vunpack.c.h.b16 %v134
  %v543 = vunpack.c.l.b16 %v135
  %v544 = vunpack.c.h.b16 %v135
  %v545 = vunpack.c.l.b16 %v136
  %v546 = vunpack.c.h.b16 %v136
  %v547 = vunpack.c.l.b16 %v137
  %v548 = vunpack.c.h.b16 %v137
  %v549 = vunpack.c.l.b16 %v138
  %v550 = vunpack.c.h.b16 %v138
  %v551 = vunpack.c.l.b16 %v139
  %v552 = vunpack.c.h.b16 %v139
  %v553 = vunpack.c.l.b16 %v140
  %v554 = vunpack.c.h.b16 %v140
  %v555 = vunpack.c.l.b16 %v141
  %v556 = vunpack.c.h.b16 %v141
  %v557 = vunpack.c.l.b16 %v142
  %v558 = vunpack.c.h.b16 %v142
  %v559 = vunpack.c.l.b16 %v143
  %v560 = vunpack.c.h.b16 %v143
  %v561 = vunpack.c.l.b16 %v144
  %v562 = vunpack.c.h.b16 %v144
  %v563 = vunpack.c.l.b16 %v145
  %v564 = vunpack.c.h.b16 %v145
  %v565 = vunpack.c.l.b16 %v146
  %v566 = vunpack.c.h.b16 %v146
  %v567 = vunpack.c.l.b16 %v147
  %v568 = vunpack.c.h.b16 %v147
  %v569 = vunpack.c.l.b16 %v148
  %v570 = vunpack.c.h.b16 %v148
  %v571 = vunpack.c.l.b16 %v149
  %v572 = vunpack.c.h.b16 %v149
  %v573 = vunpack.c.l.b16 %v150
  %v574 = vunpack.c.h.b16 %v150
  %v575 = vunpack.c.l.b16 %v151
  %v576 = vunpack.c.h.b16 %v151
  %v577 = vunpack.c.l.b16 %v152
  %v578 = vunpack.c.h.b16 %v152
  %v579 = vunpack.c.l.b16 %v153
  %v580 = vunpack.c.h.b16 %v153
  %v581 = vunpack.c.l.b16 %v154
  %v582 = vunpack.c.h.b16 %v154
  %v583 = vunpack.c.l.b16 %v155
  %v584 = vunpack.c.h.b16 %v155
  %v585 = vunpack.c.l.b16 %v156
  %v586 = vunpack.c.h.b16 %v156
  %v587 = vunpack.c.l.b16 %v157
  %v588 = vunpack.c.h.b16 %v157
  %v589 = vunpack.c.l.b16 %v158
  %v590 = vunpack.c.h.b16 %v158
  %v591 = vunpack.c.l.b16 %v159
  %v592 = vunpack.c.h.b16 %v159
  %v593 = vunpack.c.l.b16 %v160
  %v594 = vunpack.c.h.b16 %v160
  %v595 = vunpack.c.l.b16 %v161
  %v596 = vunpack.c.h.b16 %v161
  %v597 = vunpack.c.l.b16 %v162
  %v598 = vunpack.c.h.b16 %v162
  %v599 = vpack.c.b16 %v345, %v343
  %v600 = vpack.c.b16 %v346, %v344
  %v601 = vpack.c.b16 %v349, %v347
  %v602 = vpack.c.b16 %v350, %v348
  %v603 = vpack.c.b16 %v353, %v351
  %v604 = vpack.c.b16 %v354, %v352
  %v605 = vpack.c.b16 %v357, %v355
  %v606 = vpack.c.b16 %v358, %v356
  %v607 = vpack.c.b16 %v361, %v359
  %v608 = vpack.c.b16 %v362, %v360
  %v609 = vpack.c.b16 %v365, %v363
  %v610 = vpack.c.b16 %v366, %v364
  %v611 = vpack.c.b16 %v369, %v367
  %v612 = vpack.c.b16 %v370, %v368
  %v613 = vpack.c.b16 %v373, %v371
  %v614 = vpack.c.b16 %v374, %v372
  %v615 = vpack.c.b16 %v377, %v375
  %v616 = vpack.c.b16 %v378, %v376
  %v617 = vpack.c.b16 %v381, %v379
  %v618 = vpack.c.b16 %v382, %v380
  %v619 = vpack.c.b16 %v385, %v383
  %v620 = vpack.c.b16 %v386, %v384
  %v621 = vpack.c.b16 %v389, %v387
  %v622 = vpack.c.b16 %v390, %v388
  %v623 = vpack.c.b16 %v393, %v391
  %v624 = vpack.c.b16 %v394, %v392
  %v625 = vpack.c.b16 %v397, %v395
  %v626 = vpack.c.b16 %v398, %v396
  %v627 = vpack.c.b16 %v401, %v399
  %v628 = vpack.c.b16 %v402, %v400
  %v629 = vpack.c.b16 %v405, %v403
  %v630 = vpack.c.b16 %v406, %v404
  %v631 = vpack.c.b16 %v409, %v407
  %v632 = vpack.c.b16 %v410, %v408
  %v633 = vpack.c.b16 %v413, %v411
  %v634 = vpack.c.b16 %v414, %v412
  %v635 = vpack.c.b16 %v417, %v415
  %v636 = vpack.c.b16 %v418, %v416
  %v637 = vpack.c.b16 %v421, %v419
  %v638 = vpack.c.b16 %v422, %v420
  %v639 = vpack.c.b16 %v425, %v423
  %v640 = vpack.c.b16 %v426, %v424
  %v641 = vpack.c.b16 %v429, %v427
  %v642 = vpack.c.b16 %v430, %v428
  %v643 = vpack.c.b16 %v433, %v431
  %v644 = vpack.c.b16 %v434, %v432
  %v645 = vpack.c.b16 %v437, %v435
  %v646 = vpack.c.b16 %v438, %v436
  %v647 = vpack.c.b16 %v441, %v439
  %v648 = vpack.c.b16 %v442, %v440
  %v649 = vpack.c.b16 %v445, %v443
  %v650 = vpack.c.b16 %v446, %v444
  %v651 = vpack.c.b16 %v449, %v447
  %v652 = vpack.c.b16 %v450, %v448
  %v653 = vpack.c.b16 %v453, %v451
  %v654 = vpack.c.b16 %v454, %v452
  %v655 = vpack.c.b16 %v457, %v455
  %v656 = vpack.c.b16 %v458, %v456
  %v657 = vpack.c.b16 %v461, %v459
  %v658 = vpack.c.b16 %v462, %v460
  %v659 = vpack.c.b16 %v465, %v463
  %v660 = vpack.c.b16 %v466, %v464
  %v661 = vpack.c.b16 %v469, %v467
  %v662 = vpack.c.b16 %v470, %v468
  %v663 = vpack.c.b16 %v473, %v471
  %v664 = vpack.c.b16 %v474, %v472
  %v665 = vpack.c.b16 %v477, %v475
  %v666 = vpack.c.b16 %v478, %v476
  %v667 = vpack.c.b16 %v481, %v479
  %v668 = vpack.c.b16 %v482, %v480
  %v669 = vpack.c.b16 %v485, %v483
  %v670 = vpack.c.b16 %v486, %v484
  %v671 = vpack.c.b16 %v489, %v487
  %v672 = vpack.c.b16 %v490, %v488
  %v673 = vpack.c.b16 %v493, %v491
  %v674 = vpack.c.b16 %v494, %v492
  %v675 = vpack.c.b16 %v497, %v495
  %v676 = vpack.c.b16 %v498, %v496
  %v677 = vpack.c.b16 %v501, %v499
  %v678 = vpack.c.b16 %v502, %v500
  %v679 = vpack.c.b16 %v505, %v503
  %v680 = vpack.c.b16 %v506, %v504
  %v681 = vpack.c.b16 %v509, %v507
  %v682 = vpack.c.b16 %v510, %v508
  %v683 = vpack.c.b16 %v513, %v511
  %v684 = vpack.c.b16 %v514, %v512
  %v685 = vpack.c.b16 %v517, %v515
  %v686 = vpack.c.b16 %v518, %v516
  %v687 = vpack.c.b16 %v521, %v519
  %v688 = vpack.c.b16 %v522, %v520
  %v689 = vpack.c.b16 %v525, %v523
  %v690 = vpack.c.b16 %v526, %v524
  %v691 = vpack.c.b16 %v529, %v527
  %v692 = vpack.c.b16 %v530, %v528
  %v693 = vpack.c.b16 %v533, %v531
  %v694 = vpack.c.b16 %v534, %v532
  %v695 = vpack.c.b16 %v537, %v535
  %v696 = vpack.c.b16 %v538, %v536
  %v697 = vpack.c.b16 %v541, %v539
  %v698 = vpack.c.b16 %v542, %v540
  %v699 = vpack.c.b16 %v545, %v543
  %v700 = vpack.c.b16 %v546, %v544
  %v701 = vpack.c.b16 %v549, %v547
  %v702 = vpack.c.b16 %v550, %v548
  %v703 = vpack.c.b16 %v553, %v551
  %v704 = vpack.c.b16 %v554, %v552
  %v705 = vpack.c.b16 %v557, %v555
  %v706 = vpack.c.b16 %v558, %v556
  %v707 = vpack.c.b16 %v561, %v559
  %v708 = vpack.c.b16 %v562, %v560
  %v709 = vpack.c.b16 %v565, %v563
  %v710 = vpack.c.b16 %v566, %v564
  %v711 = vpack.c.b16 %v569, %v567
  %v712 = vpack.c.b16 %v570, %v568
  %v713 = vpack.c.b16 %v573, %v571
  %v714 = vpack.c.b16 %v574, %v572
  %v715 = vpack.c.b16 %v577, %v575
  %v716 = vpack.c.b16 %v578, %v576
  %v717 = vpack.c.b16 %v581, %v579
  %v718 = vpack.c.b16 %v582, %v580
  %v719 = vpack.c.b16 %v585, %v583
  %v720 = vpack.c.b16 %v586, %v584
  %v721 = vpack.c.b16 %v589, %v587
  %v722 = vpack.c.b16 %v590, %v588
  %v723 = vpack.c.b16 %v593, %v591
  %v724 = vpack.c.b16 %v594, %v592
  %v725 = vpack.c.b16 %v597, %v595
  %v726 = vpack.c.b16 %v598, %v596
  %855 = vmatprep.subr.bf16.mxu0 %v600
  %856 = vmatpush1.bf16.msra.mxu0 %v599
  %857 = vmatprep.subr.bf16.mxu0 %v602
  %858 = vmatpush1.bf16.msra.mxu0 %v601
  %859 = vmatprep.subr.bf16.mxu0 %v604
  %860 = vmatpush1.bf16.msra.mxu0 %v603
  %861 = vmatprep.subr.bf16.mxu0 %v606
  %862 = vmatpush1.bf16.msra.mxu0 %v605
  %863 = vmatprep.subr.bf16.mxu0 %v608
  %864 = vmatpush1.bf16.msra.mxu0 %v607
  %865 = vmatprep.subr.bf16.mxu0 %v610
  %866 = vmatpush1.bf16.msra.mxu0 %v609
  %867 = vmatprep.subr.bf16.mxu0 %v612
  %868 = vmatpush1.bf16.msra.mxu0 %v611
  %869 = vmatprep.subr.bf16.mxu0 %v614
  %870 = vmatpush1.bf16.msra.mxu0 %v613
  %871 = vmatprep.subr.bf16.mxu0 %v616
  %872 = vmatpush1.bf16.msra.mxu0 %v615
  %873 = vmatprep.subr.bf16.mxu0 %v618
  %874 = vmatpush1.bf16.msra.mxu0 %v617
  %875 = vmatprep.subr.bf16.mxu0 %v620
  %876 = vmatpush1.bf16.msra.mxu0 %v619
  %877 = vmatprep.subr.bf16.mxu0 %v622
  %878 = vmatpush1.bf16.msra.mxu0 %v621
  %879 = vmatprep.subr.bf16.mxu0 %v624
  %880 = vmatpush1.bf16.msra.mxu0 %v623
  %881 = vmatprep.subr.bf16.mxu0 %v626
  %882 = vmatpush1.bf16.msra.mxu0 %v625
  %883 = vmatprep.subr.bf16.mxu0 %v628
  %884 = vmatpush1.bf16.msra.mxu0 %v627
  %885 = vmatprep.subr.bf16.mxu0 %v630
  %886 = vmatpush1.bf16.msra.mxu0 %v629
  %887 = vmatprep.mubr.bf16.mxu0 %v200
  %888 = vmatmul.mubr.bf16.gmra.mrb[0].mxu0 %v199
  %v889 = vpop.f32.mrb[0].mxu0
  %v890 = vadd.f32 %v168, %v889
  %v891 = vpop.f32.mrb[0].mxu0
  %v892 = vadd.f32 %v172, %v891
  %v893 = vpop.f32.mrb[0].mxu0
  %v894 = vadd.f32 %v168, %v893
  %v895 = vpop.f32.mrb[0].mxu0
  %v896 = vadd.f32 %v172, %v895
  %897 = vdwg.mxu0
  %898 = vmatprep.subr.bf16.mxu0 %v632
  %899 = vmatpush1.bf16.msra.mxu0 %v631
  %900 = vmatprep.subr.bf16.mxu0 %v634
  %901 = vmatpush1.bf16.msra.mxu0 %v633
  %902 = vmatprep.subr.bf16.mxu0 %v636
  %903 = vmatpush1.bf16.msra.mxu0 %v635
  %904 = vmatprep.subr.bf16.mxu0 %v638
  %905 = vmatpush1.bf16.msra.mxu0 %v637
  %906 = vmatprep.subr.bf16.mxu0 %v640
  %907 = vmatpush1.bf16.msra.mxu0 %v639
  %908 = vmatprep.subr.bf16.mxu0 %v642
  %909 = vmatpush1.bf16.msra.mxu0 %v641
  %910 = vmatprep.subr.bf16.mxu0 %v644
  %911 = vmatpush1.bf16.msra.mxu0 %v643
  %912 = vmatprep.subr.bf16.mxu0 %v646
  %913 = vmatpush1.bf16.msra.mxu0 %v645
  %914 = vmatprep.subr.bf16.mxu0 %v648
  %915 = vmatpush1.bf16.msra.mxu0 %v647
  %916 = vmatprep.subr.bf16.mxu0 %v650
  %917 = vmatpush1.bf16.msra.mxu0 %v649
  %918 = vmatprep.subr.bf16.mxu0 %v652
  %919 = vmatpush1.bf16.msra.mxu0 %v651
  %920 = vmatprep.subr.bf16.mxu0 %v654
  %921 = vmatpush1.bf16.msra.mxu0 %v653
  %922 = vmatprep.subr.bf16.mxu0 %v656
  %923 = vmatpush1.bf16.msra.mxu0 %v655
  %924 = vmatprep.subr.bf16.mxu0 %v658
  %925 = vmatpush1.bf16.msra.mxu0 %v657
  %926 = vmatprep.subr.bf16.mxu0 %v660
  %927 = vmatpush1.bf16.msra.mxu0 %v659
  %928 = vmatprep.subr.bf16.mxu0 %v662
  %929 = vmatpush1.bf16.msra.mxu0 %v661
  %930 = vmatprep.mubr.bf16.mxu0 %v202
  %931 = vmatmul.mubr.bf16.gmra.mrb[0].mxu0 %v201
  %v932 = vpop.f32.mrb[0].mxu0
  %v933 = vadd.f32 %v890, %v932
  %v934 = vpop.f32.mrb[0].mxu0
  %v935 = vadd.f32 %v892, %v934
  %v936 = vpop.f32.mrb[0].mxu0
  %v937 = vadd.f32 %v894, %v936
  %v938 = vpop.f32.mrb[0].mxu0
  %v939 = vadd.f32 %v896, %v938
  %940 = vdwg.mxu0
  %941 = vmatprep.subr.bf16.mxu0 %v664
  %942 = vmatpush1.bf16.msra.mxu0 %v663
  %943 = vmatprep.subr.bf16.mxu0 %v666
  %944 = vmatpush1.bf16.msra.mxu0 %v665
  %945 = vmatprep.subr.bf16.mxu0 %v668
  %946 = vmatpush1.bf16.msra.mxu0 %v667
  %947 = vmatprep.subr.bf16.mxu0 %v670
  %948 = vmatpush1.bf16.msra.mxu0 %v669
  %949 = vmatprep.subr.bf16.mxu0 %v672
  %950 = vmatpush1.bf16.msra.mxu0 %v671
  %951 = vmatprep.subr.bf16.mxu0 %v674
  %952 = vmatpush1.bf16.msra.mxu0 %v673
  %953 = vmatprep.subr.bf16.mxu0 %v676
  %954 = vmatpush1.bf16.msra.mxu0 %v675
  %955 = vmatprep.subr.bf16.mxu0 %v678
  %956 = vmatpush1.bf16.msra.mxu0 %v677
  %957 = vmatprep.subr.bf16.mxu0 %v680
  %958 = vmatpush1.bf16.msra.mxu0 %v679
  %959 = vmatprep.subr.bf16.mxu0 %v682
  %960 = vmatpush1.bf16.msra.mxu0 %v681
  %961 = vmatprep.subr.bf16.mxu0 %v684
  %962 = vmatpush1.bf16.msra.mxu0 %v683
  %963 = vmatprep.subr.bf16.mxu0 %v686
  %964 = vmatpush1.bf16.msra.mxu0 %v685
  %965 = vmatprep.subr.bf16.mxu0 %v688
  %966 = vmatpush1.bf16.msra.mxu0 %v687
  %967 = vmatprep.subr.bf16.mxu0 %v690
  %968 = vmatpush1.bf16.msra.mxu0 %v689
  %969 = vmatprep.subr.bf16.mxu0 %v692
  %970 = vmatpush1.bf16.msra.mxu0 %v691
  %971 = vmatprep.subr.bf16.mxu0 %v694
  %972 = vmatpush1.bf16.msra.mxu0 %v693
  %973 = vmatprep.mubr.bf16.mxu0 %v204
  %974 = vmatmul.mubr.bf16.gmra.mrb[0].mxu0 %v203
  %v975 = vpop.f32.mrb[0].mxu0
  %v976 = vadd.f32 %v933, %v975
  %v977 = vpop.f32.mrb[0].mxu0
  %v978 = vadd.f32 %v935, %v977
  %v979 = vpop.f32.mrb[0].mxu0
  %v980 = vadd.f32 %v937, %v979
  %v981 = vpop.f32.mrb[0].mxu0
  %v982 = vadd.f32 %v939, %v981
  %983 = vdwg.mxu0
  %984 = vmatprep.subr.bf16.mxu0 %v696
  %985 = vmatpush1.bf16.msra.mxu0 %v695
  %986 = vmatprep.subr.bf16.mxu0 %v698
  %987 = vmatpush1.bf16.msra.mxu0 %v697
  %988 = vmatprep.subr.bf16.mxu0 %v700
  %989 = vmatpush1.bf16.msra.mxu0 %v699
  %990 = vmatprep.subr.bf16.mxu0 %v702
  %991 = vmatpush1.bf16.msra.mxu0 %v701
  %992 = vmatprep.subr.bf16.mxu0 %v704
  %993 = vmatpush1.bf16.msra.mxu0 %v703
  %994 = vmatprep.subr.bf16.mxu0 %v706
  %995 = vmatpush1.bf16.msra.mxu0 %v705
  %996 = vmatprep.subr.bf16.mxu0 %v708
  %997 = vmatpush1.bf16.msra.mxu0 %v707
  %998 = vmatprep.subr.bf16.mxu0 %v710
  %999 = vmatpush1.bf16.msra.mxu0 %v709
  %1000 = vmatprep.subr.bf16.mxu0 %v712
  %1001 = vmatpush1.bf16.msra.mxu0 %v711
  %1002 = vmatprep.subr.bf16.mxu0 %v714
  %1003 = vmatpush1.bf16.msra.mxu0 %v713
  %1004 = vmatprep.subr.bf16.mxu0 %v716
  %1005 = vmatpush1.bf16.msra.mxu0 %v715
  %1006 = vmatprep.subr.bf16.mxu0 %v718
  %1007 = vmatpush1.bf16.msra.mxu0 %v717
  %1008 = vmatprep.subr.bf16.mxu0 %v720
  %1009 = vmatpush1.bf16.msra.mxu0 %v719
  %1010 = vmatprep.subr.bf16.mxu0 %v722
  %1011 = vmatpush1.bf16.msra.mxu0 %v721
  %1012 = vmatprep.subr.bf16.mxu0 %v724
  %1013 = vmatpush1.bf16.msra.mxu0 %v723
  %1014 = vmatprep.subr.bf16.mxu0 %v726
  %1015 = vmatpush1.bf16.msra.mxu0 %v725
  %1016 = vmatprep.mubr.bf16.mxu0 %v206
  %1017 = vmatmul.mubr.bf16.gmra.mrb[0].mxu0 %v205
  %v1018 = vpop.f32.mrb[0].mxu0
  %v1019 = vadd.f32 %v976, %v1018
  %v1020 = vpop.f32.mrb[0].mxu0
  %v1021 = vadd.f32 %v978, %v1020
  %v1022 = vpop.f32.mrb[0].mxu0
  %v1023 = vadd.f32 %v980, %v1022
  %v1024 = vpop.f32.mrb[0].mxu0
  %v1025 = vadd.f32 %v982, %v1024
  %1026 = vdwg.mxu0
  %v1027 = vmax.f32 %v1019, 0.0
  %v1028 = vmax.f32 %v1021, 0.0
  %v1029 = vmax.f32 %v1023, 0.0
  %v1030 = vmax.f32 %v1025, 0.0
  %v1031 = vpack.c.bf16 %v1029, %v1027
  %v1032 = vpack.c.bf16 %v1030, %v1028
  %v1033 = vld [vmem:[%s3] sm:$0xf]
  %v1034 = vld [vmem:[%s3 + $0x4] sm:$0xf]
  %v1035 = vld [vmem:[%s3 + $0x8] sm:$0xf]
  %v1036 = vld [vmem:[%s3 + $0xc] sm:$0xf]
  %v1037 = vld [vmem:[%s3 + $0x10] sm:$0xf]
  %v1038 = vld [vmem:[%s3 + $0x14] sm:$0xf]
  %v1039 = vld [vmem:[%s3 + $0x18] sm:$0xf]
  %v1040 = vld [vmem:[%s3 + $0x1c] sm:$0xf]
  %v1041 = vld [vmem:[%s3 + $0x20] sm:$0xf]
  %v1042 = vld [vmem:[%s3 + $0x24] sm:$0xf]
  %v1043 = vld [vmem:[%s3 + $0x28] sm:$0xf]
  %v1044 = vld [vmem:[%s3 + $0x2c] sm:$0xf]
  %v1045 = vld [vmem:[%s3 + $0x30] sm:$0xf]
  %v1046 = vld [vmem:[%s3 + $0x34] sm:$0xf]
  %v1047 = vld [vmem:[%s3 + $0x38] sm:$0xf]
  %v1048 = vld [vmem:[%s3 + $0x3c] sm:$0xf]
  %v1049 = vld [vmem:[%s3 + $0x40] sm:$0xf]
  %v1050 = vld [vmem:[%s3 + $0x44] sm:$0xf]
  %v1051 = vld [vmem:[%s3 + $0x48] sm:$0xf]
  %v1052 = vld [vmem:[%s3 + $0x4c] sm:$0xf]
  %v1053 = vld [vmem:[%s3 + $0x50] sm:$0xf]
  %v1054 = vld [vmem:[%s3 + $0x54] sm:$0xf]
  %v1055 = vld [vmem:[%s3 + $0x58] sm:$0xf]
  %v1056 = vld [vmem:[%s3 + $0x5c] sm:$0xf]
  %v1057 = vld [vmem:[%s3 + $0x60] sm:$0xf]
  %v1058 = vld [vmem:[%s3 + $0x64] sm:$0xf]
  %v1059 = vld [vmem:[%s3 + $0x68] sm:$0xf]
  %v1060 = vld [vmem:[%s3 + $0x6c] sm:$0xf]
  %v1061 = vld [vmem:[%s3 + $0x70] sm:$0xf]
  %v1062 = vld [vmem:[%s3 + $0x74] sm:$0xf]
  %v1063 = vld [vmem:[%s3 + $0x78] sm:$0xf]
  %v1064 = vld [vmem:[%s3 + $0x7c] sm:$0xf]
  %v1065 = vld [vmem:[%s4] sm:$0x1]
  %v1067 = vlaneseq
  %v1068 = vshrl.u32 %v1067, 7
  %v1069 = vsub.s32 0, %v1068
  %v1070 = vrot.slane %v1065, %v1069
  %v1104 = vunpack.c.l.b16 %v1033
  %v1105 = vunpack.c.l.b16 %v1034
  %v1106 = vunpack.c.l.b16 %v1035
  %v1107 = vunpack.c.l.b16 %v1036
  %v1108 = vunpack.c.l.b16 %v1037
  %v1109 = vunpack.c.l.b16 %v1038
  %v1110 = vunpack.c.l.b16 %v1039
  %v1111 = vunpack.c.l.b16 %v1040
  %v1112 = vunpack.c.l.b16 %v1041
  %v1113 = vunpack.c.l.b16 %v1042
  %v1114 = vunpack.c.l.b16 %v1043
  %v1115 = vunpack.c.l.b16 %v1044
  %v1116 = vunpack.c.l.b16 %v1045
  %v1117 = vunpack.c.l.b16 %v1046
  %v1118 = vunpack.c.l.b16 %v1047
  %v1119 = vunpack.c.l.b16 %v1048
  %v1120 = vunpack.c.l.b16 %v1049
  %v1121 = vunpack.c.l.b16 %v1050
  %v1122 = vunpack.c.l.b16 %v1051
  %v1123 = vunpack.c.l.b16 %v1052
  %v1124 = vunpack.c.l.b16 %v1053
  %v1125 = vunpack.c.l.b16 %v1054
  %v1126 = vunpack.c.l.b16 %v1055
  %v1127 = vunpack.c.l.b16 %v1056
  %v1128 = vunpack.c.l.b16 %v1057
  %v1129 = vunpack.c.l.b16 %v1058
  %v1130 = vunpack.c.l.b16 %v1059
  %v1131 = vunpack.c.l.b16 %v1060
  %v1132 = vunpack.c.l.b16 %v1061
  %v1133 = vunpack.c.l.b16 %v1062
  %v1134 = vunpack.c.l.b16 %v1063
  %v1135 = vunpack.c.l.b16 %v1064
  %v1136 = vpack.c.b16 %v1105, %v1104
  %v1137 = vpack.c.b16 %v1107, %v1106
  %v1138 = vpack.c.b16 %v1109, %v1108
  %v1139 = vpack.c.b16 %v1111, %v1110
  %v1140 = vpack.c.b16 %v1113, %v1112
  %v1141 = vpack.c.b16 %v1115, %v1114
  %v1142 = vpack.c.b16 %v1117, %v1116
  %v1143 = vpack.c.b16 %v1119, %v1118
  %v1144 = vpack.c.b16 %v1121, %v1120
  %v1145 = vpack.c.b16 %v1123, %v1122
  %v1146 = vpack.c.b16 %v1125, %v1124
  %v1147 = vpack.c.b16 %v1127, %v1126
  %v1148 = vpack.c.b16 %v1129, %v1128
  %v1149 = vpack.c.b16 %v1131, %v1130
  %v1150 = vpack.c.b16 %v1133, %v1132
  %v1151 = vpack.c.b16 %v1135, %v1134
  %1168 = vmatprep.subr.bf16.mxu0 0
  %1169 = vmatpush1.bf16.msra.mxu0 %v1136
  %1170 = vmatprep.subr.bf16.mxu0 0
  %1171 = vmatpush1.bf16.msra.mxu0 %v1137
  %1172 = vmatprep.subr.bf16.mxu0 0
  %1173 = vmatpush1.bf16.msra.mxu0 %v1138
  %1174 = vmatprep.subr.bf16.mxu0 0
  %1175 = vmatpush1.bf16.msra.mxu0 %v1139
  %1176 = vmatprep.subr.bf16.mxu0 0
  %1177 = vmatpush1.bf16.msra.mxu0 %v1140
  %1178 = vmatprep.subr.bf16.mxu0 0
  %1179 = vmatpush1.bf16.msra.mxu0 %v1141
  %1180 = vmatprep.subr.bf16.mxu0 0
  %1181 = vmatpush1.bf16.msra.mxu0 %v1142
  %1182 = vmatprep.subr.bf16.mxu0 0
  %1183 = vmatpush1.bf16.msra.mxu0 %v1143
  %1184 = vmatprep.subr.bf16.mxu0 0
  %1185 = vmatpush1.bf16.msra.mxu0 %v1144
  %1186 = vmatprep.subr.bf16.mxu0 0
  %1187 = vmatpush1.bf16.msra.mxu0 %v1145
  %1188 = vmatprep.subr.bf16.mxu0 0
  %1189 = vmatpush1.bf16.msra.mxu0 %v1146
  %1190 = vmatprep.subr.bf16.mxu0 0
  %1191 = vmatpush1.bf16.msra.mxu0 %v1147
  %1192 = vmatprep.subr.bf16.mxu0 0
  %1193 = vmatpush1.bf16.msra.mxu0 %v1148
  %1194 = vmatprep.subr.bf16.mxu0 0
  %1195 = vmatpush1.bf16.msra.mxu0 %v1149
  %1196 = vmatprep.subr.bf16.mxu0 0
  %1197 = vmatpush1.bf16.msra.mxu0 %v1150
  %1198 = vmatprep.subr.bf16.mxu0 0
  %1199 = vmatpush1.bf16.msra.mxu0 %v1151
  %1200 = vmatprep.mubr.bf16.mxu0 %v1032
  %1201 = vmatmul.mubr.bf16.gmra.mrb[0].mxu0 %v1031
  %v1202 = vpop.f32.mrb[0].mxu0
  %v1203 = vadd.f32 %v1070, %v1202
  %v1204 = vpop.f32.mrb[0].mxu0
  %v1205 = vpop.f32.mrb[0].mxu0
  %v1206 = vadd.f32 %v1070, %v1205
  %v1207 = vpop.f32.mrb[0].mxu0
  %1208 = vdwg.mxu0
  %v1209 = vmax.f32 %v1203, 0.0
  %v1210 = vmax.f32 %v1206, 0.0
  %v1211 = vpack.c.bf16 %v1210, %v1209
  %v1212 = vld [vmem:[%s5] sm:$0xf]
  %v1213 = vld [vmem:[%s5 + $0x4] sm:$0xf]
  %v1214 = vld [vmem:[%s5 + $0x8] sm:$0xf]
  %v1215 = vld [vmem:[%s5 + $0xc] sm:$0xf]
  %v1216 = vld [vmem:[%s5 + $0x10] sm:$0xf]
  %v1217 = vld [vmem:[%s5 + $0x14] sm:$0xf]
  %v1218 = vld [vmem:[%s5 + $0x18] sm:$0xf]
  %v1219 = vld [vmem:[%s5 + $0x1c] sm:$0xf]
  %v1220 = vld [vmem:[%s5 + $0x20] sm:$0xf]
  %v1221 = vld [vmem:[%s5 + $0x24] sm:$0xf]
  %v1222 = vld [vmem:[%s5 + $0x28] sm:$0xf]
  %v1223 = vld [vmem:[%s5 + $0x2c] sm:$0xf]
  %v1224 = vld [vmem:[%s5 + $0x30] sm:$0xf]
  %v1225 = vld [vmem:[%s5 + $0x34] sm:$0xf]
  %v1226 = vld [vmem:[%s5 + $0x38] sm:$0xf]
  %v1227 = vld [vmem:[%s5 + $0x3c] sm:$0xf]
  %v1228 = vld [vmem:[%s6] sm:$0x1]
  %v1230 = vlaneseq
  %v1231 = vshrl.u32 %v1230, 7
  %v1232 = vsub.s32 0, %v1231
  %v1233 = vrot.slane %v1228, %v1232
  %v1251 = vunpack.c.l.b16 %v1212
  %v1252 = vunpack.c.l.b16 %v1213
  %v1253 = vunpack.c.l.b16 %v1214
  %v1254 = vunpack.c.l.b16 %v1215
  %v1255 = vunpack.c.l.b16 %v1216
  %v1256 = vunpack.c.l.b16 %v1217
  %v1257 = vunpack.c.l.b16 %v1218
  %v1258 = vunpack.c.l.b16 %v1219
  %v1259 = vunpack.c.l.b16 %v1220
  %v1260 = vunpack.c.l.b16 %v1221
  %v1261 = vunpack.c.l.b16 %v1222
  %v1262 = vunpack.c.l.b16 %v1223
  %v1263 = vunpack.c.l.b16 %v1224
  %v1264 = vunpack.c.l.b16 %v1225
  %v1265 = vunpack.c.l.b16 %v1226
  %v1266 = vunpack.c.l.b16 %v1227
  %v1267 = vpack.c.b16 %v1252, %v1251
  %v1268 = vpack.c.b16 %v1254, %v1253
  %v1269 = vpack.c.b16 %v1256, %v1255
  %v1270 = vpack.c.b16 %v1258, %v1257
  %v1271 = vpack.c.b16 %v1260, %v1259
  %v1272 = vpack.c.b16 %v1262, %v1261
  %v1273 = vpack.c.b16 %v1264, %v1263
  %v1274 = vpack.c.b16 %v1266, %v1265
  %1283 = vmatprep.subr.bf16.mxu0 0
  %1284 = vmatpush1.bf16.msra.mxu0 %v1267
  %1285 = vmatprep.subr.bf16.mxu0 0
  %1286 = vmatpush1.bf16.msra.mxu0 %v1268
  %1287 = vmatprep.subr.bf16.mxu0 0
  %1288 = vmatpush1.bf16.msra.mxu0 %v1269
  %1289 = vmatprep.subr.bf16.mxu0 0
  %1290 = vmatpush1.bf16.msra.mxu0 %v1270
  %1291 = vmatprep.subr.bf16.mxu0 0
  %1292 = vmatpush1.bf16.msra.mxu0 %v1271
  %1293 = vmatprep.subr.bf16.mxu0 0
  %1294 = vmatpush1.bf16.msra.mxu0 %v1272
  %1295 = vmatprep.subr.bf16.mxu0 0
  %1296 = vmatpush1.bf16.msra.mxu0 %v1273
  %1297 = vmatprep.subr.bf16.mxu0 0
  %1298 = vmatpush1.bf16.msra.mxu0 %v1274
  %1299 = vmatprep.subr.bf16.mxu0 0
  %1300 = vmatpush1.bf16.msra.mxu0 0
  %1301 = vmatprep.subr.bf16.mxu0 0
  %1302 = vmatpush1.bf16.msra.mxu0 0
  %1303 = vmatprep.subr.bf16.mxu0 0
  %1304 = vmatpush1.bf16.msra.mxu0 0
  %1305 = vmatprep.subr.bf16.mxu0 0
  %1306 = vmatpush1.bf16.msra.mxu0 0
  %1307 = vmatprep.subr.bf16.mxu0 0
  %1308 = vmatpush1.bf16.msra.mxu0 0
  %1309 = vmatprep.subr.bf16.mxu0 0
  %1310 = vmatpush1.bf16.msra.mxu0 0
  %1311 = vmatprep.subr.bf16.mxu0 0
  %1312 = vmatpush1.bf16.msra.mxu0 0
  %1313 = vmatprep.subr.bf16.mxu0 0
  %1314 = vmatpush1.bf16.msra.mxu0 0
  %1315 = vmatprep.mubr.bf16.mxu0 0
  %1316 = vmatmul.mubr.bf16.gmra.mrb[0].mxu0 %v1211
  %v1317 = vpop.f32.mrb[0].mxu0
  %v1318 = vadd.f32 %v1233, %v1317
  %v1319 = vpop.f32.mrb[0].mxu0
  %v1320 = vpop.f32.mrb[0].mxu0
  %v1321 = vadd.f32 %v1233, %v1320
  %v1322 = vpop.f32.mrb[0].mxu0
  %1323 = vdwg.mxu0
  %v1324 = vxor.u32 %v1318, 2147483648
  %v1325 = vxor.u32 %v1321, 2147483648
  %v1326 = vmul.f32 %v1324, 1.442695
  %v1327 = vpow.pop %v1326
  %v1328 = vmul.f32 %v1325, 1.442695
  %v1329 = vpow.pop %v1328
  %v1330 = vadd.f32 %v1327, 1.0
  %v1331 = vadd.f32 %v1329, 1.0
  %v1332 = vrcp.pop %v1330
  %v1333 = vmul.f32 1.0, %v1332
  %v1334 = vrcp.pop %v1331
  %v1335 = vmul.f32 1.0, %v1334
  %1336 = vst [vmem:[%s7] sm:$0xff] %v1333
  %1337 = vst [vmem:[%s7 + $0x8] sm:$0xff] %v1335
  // Predicated region
  $region30: #{mlp_forward.1} parent=0 // pred_check
    _
  $region31: #{mlp_forward.1} parent=0 // pred_check_branch
    %1339 = sbr.rel (0) target = $region33
  $region32: #{mlp_forward.1} parent=0 // pred_region
    _
  $region33: #{mlp_forward.1} parent=0 // pred_fallthru
    _
  // Predicated region
  $region34: #{mlp_forward.1} parent=0 // pred_check
    _
  $region35: #{mlp_forward.1} parent=0 // pred_check_branch
    %1341 = sbr.rel (0) target = $region37
  $region36: #{mlp_forward.1} parent=0 // pred_region
    _
  $region37: #{mlp_forward.1} parent=0 // pred_fallthru
    _

</llo_original>
